<compile_context>
chip_gen: v5e
topology: v5e:2x2
jax: 0.10.0
libtpu: 0.0.40
codegen_flags: <defaults>
</compile_context>

<pallas_src>
import jax
import jax.numpy as jnp
from jax.experimental import pallas as pl
from jax.experimental.pallas import tpu as pltpu


def simpler_kernel(x_ref, wb_ref, o_ref):
    # x_ref : (1,)   f32 in SMEM (the torch.ones(1) scalar)
    # wb_ref: (2, T) in VMEM; row 0 = W[:, 0], row 1 = bias (possibly bf16)
    # o_ref : (1, T) f32 in VMEM
    x = x_ref[0]                              # SMEM scalar read
    wb = wb_ref[...].astype(jnp.float32)      # single vld of the tile, upcast if bf16
    z = x * wb[0:1, :] + wb[1:2, :]           # (1, T) FMA on the VPU
    # (sigmoid(z) - 0.5) * 0.6 + 0.5  ==  0.6 * sigmoid(z) + 0.2   (EUP sigmoid)
    o_ref[...] = jax.nn.sigmoid(z) * 0.6 + 0.2


def prepare_params(weight, bias, param_dtype=jnp.float32):
    """One-time parameter prep (hoisted out of the per-call path).

    weight: (N, 1), bias: (N,) -> fused (2, N) operand (row 0 = W[:,0], row 1 = b).
    Use param_dtype=jnp.bfloat16 for large N to halve the HBM read; the kernel
    upcasts to f32 internally.
    """
    n = weight.shape[0]
    return jnp.stack(
        [weight.reshape(n).astype(jnp.float32), bias.reshape(n).astype(jnp.float32)],
        axis=0,
    ).astype(param_dtype)


def simpler_forward(x, wb, *, block_n=512):
    """x: (1,), wb: (2, N) fused params -> (N,) output."""
    n = wb.shape[1]
    x1 = x.reshape(1).astype(jnp.float32)     # (1,) scalar in SMEM

    if n >= block_n and n % block_n == 0:
        # Large N: lane-dense 1-D grid over N. Unmasked vst stores, double-buffered
        # DMA of the (2, TN) param tiles, and both TensorCores on v7x via "parallel".
        out = pl.pallas_call(
            simpler_kernel,
            out_shape=jax.ShapeDtypeStruct((1, n), jnp.float32),
            grid=(n // block_n,),
            in_specs=[
                pl.BlockSpec(memory_space=pltpu.SMEM),            # scalar x (untiled)
                pl.BlockSpec((2, block_n), lambda i: (0, i)),     # fused (w, b) tile
            ],
            out_specs=pl.BlockSpec((1, block_n), lambda i: (0, i)),
            compiler_params=pltpu.CompilerParams(
                dimension_semantics=("parallel",)
            ),
        )(x1, wb)
    else:
        # Small N: gridless full-array body. Fixed dispatch/DMA overhead dominates;
        # keep the body minimal.
        out = pl.pallas_call(
            simpler_kernel,
            out_shape=jax.ShapeDtypeStruct((1, n), jnp.float32),
            in_specs=[
                pl.BlockSpec(memory_space=pltpu.SMEM),    # scalar x
                pl.BlockSpec(memory_space=pltpu.VMEM),    # fused (w, b)
            ],
            out_specs=pl.BlockSpec(memory_space=pltpu.VMEM),
        )(x1, wb)
    return out.reshape(n)


def reference_forward(x, weight, bias):
    z = x @ weight.T + bias               # (1,) @ (1, N) -> (N,)
    y = jax.nn.sigmoid(z)
    return (y - 0.5) * 0.6 + 0.5


if __name__ == "__main__":
    key = jax.random.PRNGKey(0)
    x = jnp.ones((1,), dtype=jnp.float32)  # forward() hardcodes torch.ones(1)

    # --- small shape consistent with the module (output_num = 32), gridless path ---
    output_num = 32
    kw, kb = jax.random.split(key)
    # torch.nn.Linear(1, N) default init: U(-1/sqrt(in), 1/sqrt(in)) = U(-1, 1)
    weight = jax.random.uniform(kw, (output_num, 1), jnp.float32, -1.0, 1.0)
    bias = jax.random.uniform(kb, (output_num,), jnp.float32, -1.0, 1.0)

    wb = prepare_params(weight, bias)               # one-time prep, not per-call
    out = jax.block_until_ready(simpler_forward(x, wb))
    ref = reference_forward(x, weight, bias)
    assert out.shape == (output_num,)
    assert jnp.allclose(out, ref, atol=1e-6, rtol=1e-6)

    # --- larger N exercises the lane-dense gridded ("parallel") path ---
    big_n = 1024
    kw2, kb2 = jax.random.split(jax.random.PRNGKey(1))
    weight2 = jax.random.uniform(kw2, (big_n, 1), jnp.float32, -1.0, 1.0)
    bias2 = jax.random.uniform(kb2, (big_n,), jnp.float32, -1.0, 1.0)
    wb2 = prepare_params(weight2, bias2)
    out2 = jax.block_until_ready(simpler_forward(x, wb2))
    ref2 = reference_forward(x, weight2, bias2)
    assert out2.shape == (big_n,)
    assert jnp.allclose(out2, ref2, atol=1e-6, rtol=1e-6)

    print("KERNEL_OK")
</pallas_src>

<mosaic_0001>
module attributes {stable_mosaic.version = 11 : i64} {
  func.func @simpler_kernel(%arg0: memref<1xf32, #tpu.memory_space<smem>>, %arg1: memref<2x32xf32, #tpu.memory_space<vmem>>, %arg2: memref<1x32xf32, #tpu.memory_space<vmem>>) attributes {dimension_semantics = [], scalar_prefetch = 0 : i64, scratch_operands = 0 : i64, tpu.core_type = #tpu.core_type<tc>} {
    %c0 = arith.constant 0 : index
    %0 = memref.load %arg0[%c0] : memref<1xf32, #tpu.memory_space<smem>>
    %c0_0 = arith.constant 0 : index
    %c0_1 = arith.constant 0 : index
    %1 = vector.load %arg1[%c0_0, %c0_1] : memref<2x32xf32, #tpu.memory_space<vmem>>, vector<2x32xf32>
    %2 = vector.extract_strided_slice %1 {offsets = [0, 0], sizes = [1, 32], strides = [1, 1]} : vector<2x32xf32> to vector<1x32xf32>
    %3 = vector.broadcast %0 : f32 to vector<1x32xf32>
    %4 = arith.mulf %3, %2 : vector<1x32xf32>
    %5 = vector.extract_strided_slice %1 {offsets = [1, 0], sizes = [1, 32], strides = [1, 1]} : vector<2x32xf32> to vector<1x32xf32>
    %6 = arith.addf %4, %5 : vector<1x32xf32>
    %7 = arith.negf %6 : vector<1x32xf32>
    %8 = math.exp %7 : vector<1x32xf32>
    %cst = arith.constant 1.000000e+00 : f32
    %9 = vector.broadcast %cst : f32 to vector<1x32xf32>
    %10 = arith.addf %9, %8 : vector<1x32xf32>
    %11 = arith.divf %9, %10 : vector<1x32xf32>
    %cst_2 = arith.constant 6.000000e-01 : f32
    %12 = vector.broadcast %cst_2 : f32 to vector<1x32xf32>
    %13 = arith.mulf %11, %12 : vector<1x32xf32>
    %cst_3 = arith.constant 2.000000e-01 : f32
    %14 = vector.broadcast %cst_3 : f32 to vector<1x32xf32>
    %15 = arith.addf %13, %14 : vector<1x32xf32>
    %c0_4 = arith.constant 0 : index
    %c0_5 = arith.constant 0 : index
    %16 = vector.load %arg2[%c0_4, %c0_5] : memref<1x32xf32, #tpu.memory_space<vmem>>, vector<1x32xf32>
    tpu.vector_store %arg2[%c0_4, %c0_5], %15 {strides = array<i32>} : memref<1x32xf32, #tpu.memory_space<vmem>>, vector<1x32xf32>,
    return
  }
}

</mosaic_0001>

<llo_original>
// kernel: tpu_custom_call.1
$region0: #{tpu_custom_call.1}
  #allocation0 [shape = 'u32[]', space=smem, size = 0x4, offset = 0x4, fixed_abs, tag = 'smem constant byte address 0x4 - core index']
  #allocation1 [shape = 'u32[72,128]{1,0:T(1,128)}', space=vmem, size = 0x9000, scoped, tag = 'internal scratch']
  #allocation2 [shape = 'f32[1]{0:T(128)S(6)}', space=smem, size = 0x200, scoped, tag = 'scoped memory for tpu_custom_call.1']
  %s0 = inlined_call_operand.<no memory space> [shape: f32[1], index: 0, kind: input, shape index: {}]
  %s1 = inlined_call_operand.vmem [shape: f32[2,32], index: 1, kind: input, shape index: {}]
  %s2 = inlined_call_operand.hbm [shape: f32[1,32], index: 2, kind: output, shape index: {}]
  %s3 = sld [smem:[#allocation0]]
  $region18: #{tpu_custom_call.1} parent=0
    _
  %s5 = ssub.s32 1, %s3
  %s6 = scalar_select 0, %s5, %s3
  %7 = sst [smem:[#allocation2]] %s0
  $region1: #{tpu_custom_call.1} parent=0
    #allocation3 [shape = 'u8[512]{0}', space=vmem, size = 0x400, scoped, tag = 'output window, operand 0, single buffered']
    #allocation4 [shape = 's32[1]{0}', space=sflag, size = 0x4, scoped, tag = 'scoped memory for tpu_custom_call.1']
    %8 = vsyncpa [#allocation4], 0
    // Predicated region
    $region2: #{tpu_custom_call.1} parent=1 // pred_check
      _
    $region3: #{tpu_custom_call.1} parent=1 // pred_check_branch
      %10 = sbr.rel (0) target = $region5
    $region4: #{tpu_custom_call.1} parent=1 // pred_region
      _
    $region5: #{tpu_custom_call.1} parent=1 // pred_fallthru
      _
    // Predicated region
    $region6: #{tpu_custom_call.1} parent=1 // pred_check
      _
    $region7: #{tpu_custom_call.1} parent=1 // pred_check_branch
      %12 = sbr.rel (0) target = $region9
    $region8: #{tpu_custom_call.1} parent=1 // pred_region
      _
    $region9: #{tpu_custom_call.1} parent=1 // pred_fallthru
      _
    %s13 = sld [smem:[#allocation2]]
    %v14 = vld [vmem:[%s1] sm:$0x3]
    %v15 = vstv %s13
    %v16 = vmul.f32 %v15, %v14
    %v18 = vrot.slane %v14, 1
    %v20 = vadd.f32 %v16, %v18
    %v21 = vxor.u32 %v20, 2147483648
    %v22 = vmul.f32 %v21, 1.442695
    %v23 = vpow.pop %v22
    %v24 = vadd.f32 %v23, 1.0
    %v25 = vrcp.pop %v24
    %v26 = vmul.f32 %v24, %v25
    %v27 = vsub.f32 1.0, %v26
    %v28 = vmul.f32 %v25, %v27
    %v29 = vadd.f32 %v25, %v28
    %vm30 = vweird.f32 %v24
    %vm31 = vweird.f32 %v25
    %vm32 = vmor %vm30, %vm31
    %v33 = vsel %vm32, %v25, %v29
    %v34 = vand.u32 2147483647, %v24
    %vm35 = vcmp.eq.f32.partialorder %v34, 8.507059e+37
    %v36 = vand.u32 %v24, 2147483648
    %v37 = vor.u32 1.1754944e-38, %v36
    %v38 = vsel %vm35, %v37, %v33
    %v39 = vmul.f32 1.0, %v38
    %v40 = vmul.f32 %v39, 0.6
    %v41 = vadd.f32 %v40, 0.2
    %vm42 = vcmask 253952
    %43 = vst.msk [vmem:[#allocation3] sm:$0x1] %vm42, %v41
    // Predicated region
    $region10: #{tpu_custom_call.1} parent=1 // pred_check
      _
    $region11: #{tpu_custom_call.1} parent=1 // pred_check_branch
      %45 = sbr.rel (0) target = $region13
    $region12: #{tpu_custom_call.1} parent=1 // pred_region
      %47 = vsyncadd [#allocation4], 0
      %s49 = sshll.u32 [#allocation3], 4
      %s50 = int_to_ptr.vmem [resolvable:$true] %s49
      %s51 = sshll.u32 %s2, 4
      %s52 = int_to_ptr.hbm [resolvable:$true] %s51
      %54 = dma.vmem_to_hbm [thread:$0]  %s50, 16, %s52, [#allocation4]
    $region13: #{tpu_custom_call.1} parent=1 // pred_fallthru
      _
    // Predicated region
    $region14: #{tpu_custom_call.1} parent=1 // pred_check
      _
    $region15: #{tpu_custom_call.1} parent=1 // pred_check_branch
      %56 = sbr.rel (0) target = $region17
    $region16: #{tpu_custom_call.1} parent=1 // pred_region
      %58 = dma.done [#allocation4], 16
    $region17: #{tpu_custom_call.1} parent=1 // pred_fallthru
      _
    %59 = vsyncpa [#allocation4], 1

</llo_original>
